<compile_context>
chip_gen: v7x
topology: tpu7x:2x2x1
jax: 0.10.0
libtpu: 0.0.40
codegen_flags: <defaults>
</compile_context>

<pallas_src>
import functools
import math

import jax
import jax.numpy as jnp
from jax.experimental import pallas as pl
from jax.experimental.pallas import tpu as pltpu

_INV_SQRT2 = 1.0 / math.sqrt(2.0)


def _round_up(x, m):
    return (x + m - 1) // m * m


def _gelu(h, approximate):
    if approximate:
        # tanh-based GELU runs on the EUP (its own VLIW slot) instead of a
        # long erf polynomial on the VALU; ~1e-3 delta vs exact.
        return jax.nn.gelu(h, approximate=True)
    return 0.5 * h * (1.0 + jax.lax.erf(h * _INV_SQRT2))


def _transform_kernel_fused(x_ref, w_ref, b_ref, out_ref, *, approximate):
    """Full-K path.  x_ref: (TM, D) bf16, w_ref: (D, Gp) bf16 (scale folded),
    b_ref: (1, Gp) f32 (zero in padded cols), out_ref: (TM, Gp)."""
    h = jnp.dot(x_ref[...], w_ref[...], preferred_element_type=jnp.float32)
    h = h + b_ref[...]
    out_ref[...] = _gelu(h, approximate).astype(out_ref.dtype)


def _transform_kernel_ktiled(x_ref, w_ref, b_ref, out_ref, acc_ref, *,
                             approximate):
    """K-tiled path.  Grid = (row tiles, K tiles); acc_ref: (TM, Gp) f32."""
    k = pl.program_id(1)

    @pl.when(k == 0)
    def _():
        acc_ref[...] = jnp.zeros_like(acc_ref)

    acc_ref[...] += jnp.dot(x_ref[...], w_ref[...],
                            preferred_element_type=jnp.float32)

    @pl.when(k == pl.num_programs(1) - 1)
    def _():
        h = acc_ref[...] + b_ref[...]
        out_ref[...] = _gelu(h, approximate).astype(out_ref.dtype)


class CustomizedEmbeddingPallas:
    """Pallas port of utils/layers.py::CustomizedEmbedding (forward only)."""

    def __init__(self, concept_num, concept_dim, gnn_dim, key,
                 init_range=0.02, scale=1.0, tile_m=512, tile_k=512,
                 gelu_approximate=False, out_dtype=jnp.float32):
        self.scale = float(scale)
        self.concept_dim = concept_dim
        self.gnn_dim = gnn_dim
        self.tile_m = tile_m            # row tile (multiple of 8)
        self.tile_k = tile_k            # K (concept_dim) tile cap (mult of 128)
        self.gelu_approximate = bool(gelu_approximate)
        self.out_dtype = out_dtype

        k_emb, k_w, k_b = jax.random.split(key, 3)
        # nn.Embedding(concept_num + 1, concept_dim).weight.normal_(0, init_range)
        self.emb_weight = init_range * jax.random.normal(
            k_emb, (concept_num + 1, concept_dim), jnp.float32)

        self.has_transform = (concept_dim != gnn_dim)
        if self.has_transform:
            # nn.Linear(concept_dim, gnn_dim) default init; stored transposed.
            bound = 1.0 / math.sqrt(concept_dim)
            self.w_t = jax.random.uniform(
                k_w, (concept_dim, gnn_dim), jnp.float32, -bound, bound)
            self.b = jax.random.uniform(
                k_b, (gnn_dim,), jnp.float32, -bound, bound)

            # Kernel-side parameters: scale folded into W (exact rewrite
            # (s*x)W == x(sW)), lane-padded to a multiple of 128 so the output
            # store is an unmasked lane-dense vst, and cast to bf16 for the
            # MXU's native path (f32 accumulation in the kernel).
            gp = _round_up(gnn_dim, 128)
            self.g_pad = gp
            w_scaled = (self.scale * self.w_t).astype(jnp.bfloat16)
            self.w_kernel = jnp.zeros((concept_dim, gp), jnp.bfloat16
                                      ).at[:, :gnn_dim].set(w_scaled)
            self.b_kernel = jnp.zeros((1, gp), jnp.float32
                                      ).at[:, :gnn_dim].set(self.b)
            # bf16 gather table: halves the gather's HBM read bytes.
            self.emb_bf16 = self.emb_weight.astype(jnp.bfloat16)
        else:
            # Scale folded into the table once -> jnp.take output is final
            # (saves a full (n, D) read+write pass on a gather-bound path).
            self.emb_scaled = self.scale * self.emb_weight

    def __call__(self, index):
        bz, a = index.shape
        n = bz * a
        vmax = self.emb_weight.shape[0] - 1
        # NOTE: torch nn.Embedding raises on out-of-range indices; we clamp.
        ids = jnp.clip(index.reshape(n).astype(jnp.int32), 0, vmax)

        if not self.has_transform:
            # Pure gather (scale already folded into the table) — XLA gather
            # beats a per-row DMA loop on every TPU generation.
            return jnp.take(self.emb_scaled, ids, axis=0).reshape(
                bz, a, self.concept_dim)

        d, g, gp = self.concept_dim, self.gnn_dim, self.g_pad

        # Gather hoisted to XLA; dense (n, D) bf16 activation fed to the kernel.
        x = jnp.take(self.emb_bf16, ids, axis=0)                  # (n, D) bf16

        # Row tiling: big tiles to amortize the ~0.35 us/step overhead, but
        # keep >= 2 parallel steps whenever possible so both v7x TCs are used.
        tm = min(self.tile_m, _round_up(n, 8))
        if n > 8:
            tm = min(tm, _round_up((n + 1) // 2, 8))
        n_pad = _round_up(n, tm)
        if n_pad != n:
            # Padded rows produce garbage after bias+GELU; they are sliced off
            # below and must never be handed downstream unmasked.
            x = jnp.pad(x, ((0, n_pad - n), (0, 0)))

        out_bytes = jnp.dtype(self.out_dtype).itemsize
        use_ktiled = (d % 128 == 0) and (d > self.tile_k)

        if use_ktiled:
            tk = self.tile_k if d % self.tile_k == 0 else math.gcd(d, self.tile_k)
            need = (tm * tk * 2 * 2            # x tile, bf16, double-buffered
                    + tk * gp * 2 * 2          # W tile, bf16, double-buffered
                    + gp * 4                   # bias, single-buffered
                    + tm * gp * out_bytes * 2  # out tile, double-buffered
                    + tm * gp * 4)             # f32 accumulator scratch
            vmem_limit = min(110 << 20, max(8 << 20, int(need * 1.3) + (2 << 20)))
            kernel = functools.partial(_transform_kernel_ktiled,
                                       approximate=self.gelu_approximate)
            out = pl.pallas_call(
                kernel,
                out_shape=jax.ShapeDtypeStruct((n_pad, gp), self.out_dtype),
                grid=(n_pad // tm, d // tk),
                in_specs=[
                    pl.BlockSpec((tm, tk), lambda i, k: (i, k)),
                    pl.BlockSpec((tk, gp), lambda i, k: (k, 0)),
                    pl.BlockSpec((1, gp), lambda i, k: (0, 0),
                                 pipeline_mode=pl.Buffered(1)),
                ],
                out_specs=pl.BlockSpec((tm, gp), lambda i, k: (i, 0)),
                scratch_shapes=[pltpu.VMEM((tm, gp), jnp.float32)],
                compiler_params=pltpu.CompilerParams(
                    dimension_semantics=("parallel", "arbitrary"),
                    vmem_limit_bytes=vmem_limit),
            )(x, self.w_kernel, self.b_kernel)
        else:
            need = (tm * d * 2 * 2             # x tile, bf16, double-buffered
                    + d * gp * 2               # resident W, single-buffered
                    + gp * 4                   # bias, single-buffered
                    + tm * gp * out_bytes * 2) # out tile, double-buffered
            vmem_limit = min(110 << 20, max(8 << 20, int(need * 1.3) + (2 << 20)))
            kernel = functools.partial(_transform_kernel_fused,
                                       approximate=self.gelu_approximate)
            out = pl.pallas_call(
                kernel,
                out_shape=jax.ShapeDtypeStruct((n_pad, gp), self.out_dtype),
                grid=(n_pad // tm,),
                in_specs=[
                    pl.BlockSpec((tm, d), lambda i: (i, 0)),
                    pl.BlockSpec((d, gp), lambda i: (0, 0),
                                 pipeline_mode=pl.Buffered(1)),
                    pl.BlockSpec((1, gp), lambda i: (0, 0),
                                 pipeline_mode=pl.Buffered(1)),
                ],
                out_specs=pl.BlockSpec((tm, gp), lambda i: (i, 0)),
                compiler_params=pltpu.CompilerParams(
                    dimension_semantics=("parallel",),
                    vmem_limit_bytes=vmem_limit),
            )(x, self.w_kernel, self.b_kernel)

        # Conditional slicing: skip row/column slices when no padding was added
        # (avoids an extra HBM copy pass on an already memory-bound op).
        if n_pad != n:
            out = out[:n]
        if gp != g:
            out = out[:, :g]
        return out.reshape(bz, a, g)


def _reference(mod, index):
    x = jnp.take(mod.emb_weight, index, axis=0) * mod.scale
    if mod.has_transform:
        h = jnp.einsum("bad,dg->bag", x, mod.w_t) + mod.b
        return _gelu(h, mod.gelu_approximate)
    return x


if __name__ == "__main__":
    key = jax.random.PRNGKey(0)
    k_p1, k_p2, k_p3, k_i1, k_i2, k_i3 = jax.random.split(key, 6)

    # ---- Path 1: fused kernel (concept_dim != gnn_dim), small shapes --------
    concept_num, concept_dim, gnn_dim = 50, 32, 64
    bz, a = 2, 8
    index = jax.random.randint(k_i1, (bz, a), 0, concept_num + 1, dtype=jnp.int32)
    mod = CustomizedEmbeddingPallas(concept_num, concept_dim, gnn_dim,
                                    key=k_p1, scale=2.0)
    out = jax.block_until_ready(mod(index))
    ref = jax.block_until_ready(_reference(mod, index))
    assert out.shape == (bz, a, gnn_dim)
    assert jnp.allclose(out, ref, rtol=2e-2, atol=2e-2), "fused path mismatch"

    # Same module, larger non-tile-aligned token count (padding + multi-step grid).
    bz2, a2 = 3, 100
    index_big = jax.random.randint(k_i2, (bz2, a2), 0, concept_num + 1,
                                   dtype=jnp.int32)
    out_big = jax.block_until_ready(mod(index_big))
    ref_big = jax.block_until_ready(_reference(mod, index_big))
    assert out_big.shape == (bz2, a2, gnn_dim)
    assert jnp.allclose(out_big, ref_big, rtol=2e-2, atol=2e-2), \
        "fused path (padded) mismatch"

    # ---- Path 2: K-tiled accumulator kernel (forced via small tile_k) -------
    mod_k = CustomizedEmbeddingPallas(60, 256, 200, key=k_p2, scale=1.3,
                                      tile_k=128)
    bz3, a3 = 2, 16
    index_k = jax.random.randint(k_i3, (bz3, a3), 0, 61, dtype=jnp.int32)
    out_k = jax.block_until_ready(mod_k(index_k))
    ref_k = jax.block_until_ready(_reference(mod_k, index_k))
    assert out_k.shape == (bz3, a3, 200)
    assert jnp.allclose(out_k, ref_k, rtol=2e-2, atol=2e-2), "K-tiled path mismatch"

    # ---- Path 3: no transform (concept_dim == gnn_dim) -> scaled gather -----
    mod2 = CustomizedEmbeddingPallas(concept_num, concept_dim, concept_dim,
                                     key=k_p3, scale=1.5)
    out2 = jax.block_until_ready(mod2(index))
    ref2 = jax.block_until_ready(_reference(mod2, index))
    assert out2.shape == (bz, a, concept_dim)
    assert jnp.allclose(out2, ref2, rtol=1e-5, atol=1e-5), "no-transform mismatch"

    print("KERNEL_OK")
</pallas_src>

<mosaic_0001>
module attributes {stable_mosaic.version = 11 : i64} {
  func.func @_transform_kernel_fused(%arg0: i32, %arg1: memref<8x32xbf16, #tpu.memory_space<vmem>>, %arg2: memref<32x128xbf16, #tpu.memory_space<vmem>>, %arg3: memref<1x128xf32, #tpu.memory_space<vmem>>, %arg4: memref<8x128xf32, #tpu.memory_space<vmem>>) attributes {dimension_semantics = [#tpu.dimension_semantics<parallel>], iteration_bounds = array<i64: 2>, scalar_prefetch = 0 : i64, scratch_operands = 0 : i64, tpu.core_type = #tpu.core_type<tc>, window_params = [{transform_indices = @transform_0, window_bounds = array<i64: 8, 32>}, {pipeline_mode = #tpu.pipeline_mode<synchronous>, transform_indices = @transform_1, window_bounds = array<i64: 32, 128>}, {pipeline_mode = #tpu.pipeline_mode<synchronous>, transform_indices = @transform_2, window_bounds = array<i64: 1, 128>}, {transform_indices = @transform_3, window_bounds = array<i64: 8, 128>}]} {
    %c0 = arith.constant 0 : index
    %c0_0 = arith.constant 0 : index
    %0 = vector.load %arg1[%c0, %c0_0] : memref<8x32xbf16, #tpu.memory_space<vmem>>, vector<8x32xbf16>
    %c0_1 = arith.constant 0 : index
    %c0_2 = arith.constant 0 : index
    %1 = vector.load %arg2[%c0_1, %c0_2] : memref<32x128xbf16, #tpu.memory_space<vmem>>, vector<32x128xbf16>
    %cst = arith.constant dense<0.000000e+00> : vector<8x128xf32>
    %2 = tpu.matmul %0, %1, %cst {dimension_numbers = #tpu.dot_dimension_numbers<[1], [0], [0], [1], [0, 0, 1, 1], [], []>} : vector<8x32xbf16>, vector<32x128xbf16>, vector<8x128xf32> -> vector<8x128xf32>
    %c0_3 = arith.constant 0 : index
    %c0_4 = arith.constant 0 : index
    %3 = vector.load %arg3[%c0_3, %c0_4] : memref<1x128xf32, #tpu.memory_space<vmem>>, vector<1x128xf32>
    %4 = vector.broadcast %3 : vector<1x128xf32> to vector<8x128xf32>
    %5 = arith.addf %2, %4 : vector<8x128xf32>
    %cst_5 = arith.constant 5.000000e-01 : f32
    %6 = vector.broadcast %cst_5 : f32 to vector<8x128xf32>
    %7 = arith.mulf %6, %5 : vector<8x128xf32>
    %cst_6 = arith.constant 0.707106769 : f32
    %8 = vector.broadcast %cst_6 : f32 to vector<8x128xf32>
    %9 = arith.mulf %5, %8 : vector<8x128xf32>
    %10 = math.erf %9 : vector<8x128xf32>
    %cst_7 = arith.constant 1.000000e+00 : f32
    %11 = vector.broadcast %cst_7 : f32 to vector<8x128xf32>
    %12 = arith.addf %11, %10 : vector<8x128xf32>
    %13 = arith.mulf %7, %12 : vector<8x128xf32>
    %c0_8 = arith.constant 0 : index
    %c0_9 = arith.constant 0 : index
    %14 = vector.load %arg4[%c0_8, %c0_9] : memref<8x128xf32, #tpu.memory_space<vmem>>, vector<8x128xf32>
    tpu.vector_store %arg4[%c0_8, %c0_9], %13 {strides = array<i32>} : memref<8x128xf32, #tpu.memory_space<vmem>>, vector<8x128xf32>,
    return
  }
  func.func @transform_0(%arg0: i32) -> (i32, i32) {
    %c0_i32 = arith.constant 0 : i32
    %c0_i32_0 = arith.constant 0 : i32
    return %arg0, %c0_i32 : i32, i32
  }
  func.func @transform_1(%arg0: i32) -> (i32, i32) {
    %c0_i32 = arith.constant 0 : i32
    %c0_i32_0 = arith.constant 0 : i32
    %c0_i32_1 = arith.constant 0 : i32
    return %c0_i32, %c0_i32_0 : i32, i32
  }
  func.func @transform_2(%arg0: i32) -> (i32, i32) {
    %c0_i32 = arith.constant 0 : i32
    %c0_i32_0 = arith.constant 0 : i32
    %c0_i32_1 = arith.constant 0 : i32
    return %c0_i32, %c0_i32_0 : i32, i32
  }
  func.func @transform_3(%arg0: i32) -> (i32, i32) {
    %c0_i32 = arith.constant 0 : i32
    %c0_i32_0 = arith.constant 0 : i32
    return %arg0, %c0_i32 : i32, i32
  }
}

</mosaic_0001>

<llo_original>
// kernel: tpu_custom_call.1
$region0: #{tpu_custom_call.1}
  #allocation0 [shape = 'u32[]', space=smem, size = 0x4, offset = 0x4, fixed_abs, tag = 'smem constant byte address 0x4 - core index']
  #allocation1 [shape = 'u32[144,128]{1,0:T(1,128)}', space=vmem, size = 0x12000, scoped, tag = 'internal scratch']
  %s0 = inlined_call_operand.hbm [shape: bf16[16,32], index: 0, kind: input, shape index: {}]
  %s1 = inlined_call_operand.hbm [shape: bf16[32,128], index: 1, kind: input, shape index: {}]
  %s2 = inlined_call_operand.vmem [shape: f32[1,128], index: 2, kind: input, shape index: {}]
  %s3 = inlined_call_operand.hbm [shape: f32[16,128], index: 3, kind: output, shape index: {}]
  %s4 = sld [smem:[#allocation0]]
  $region53: #{tpu_custom_call.1} parent=0
    _
  %s6 = ssub.s32 1, %s4
  %s7 = scalar_select 0, %s6, %s4
  $region1: #{tpu_custom_call.1} parent=0
    #allocation2 [shape = 'u8[4096]{0}', space=vmem, size = 0x1000, scoped, tag = 'input window, operand 0']
    #allocation3 [shape = 's32[2]{0}', space=sflag, size = 0x8, scoped, tag = 'scoped memory for tpu_custom_call.1']
    #allocation4 [shape = 's32[2]{0}', space=sflag, size = 0x8, scoped, tag = 'scoped memory for tpu_custom_call.1']
    #allocation5 [shape = 'u8[8192]{0}', space=vmem, size = 0x2000, scoped, tag = 'input window, operand 1, single buffered']
    #allocation6 [shape = 's32[1]{0}', space=sflag, size = 0x4, scoped, tag = 'scoped memory for tpu_custom_call.1']
    #allocation7 [shape = 'u8[8192]{0}', space=vmem, size = 0x2000, scoped, tag = 'output window, operand 0']
    %8 = vsyncpa [#allocation3], 0
    %s9 = scalar_lea.sflag [#allocation3], 1
    %10 = vsyncpa %s9, 0
    %11 = vsyncpa [#allocation6], 0
    %12 = vsyncpa [#allocation4], 0
    %s13 = scalar_lea.sflag [#allocation4], 1
    %14 = vsyncpa %s13, 0
    loop: start=0, step=1, limit=4
    $region2: #{tpu_custom_call.1} parent=1 // loop_pre_header
      _
    $region3: #{tpu_custom_call.1} parent=1 // loop_header
      %s16 = sphi 0, %s20
      %p17 = scmp.ge.s32.totalorder %s16, 4
      %s26 = sphi 0, %s28
      %s29 = sphi 0, %s26
      %s30 = sphi 0, %s29
      %s46 = sphi 0, %s30
      %s50 = sphi 0, %s50
      %s52 = sphi 0, %s50
      %s53 = sphi 0, %s52
      %s67 = sphi 0, %s53
      %s71 = sphi 0, %s71
      %s73 = sphi 0, %s71
      %s74 = sphi 0, %s73
      %s88 = sphi 0, %s74
      %s94 = sphi 0, %s96
      %s97 = sphi 0, %s94
      %s98 = sphi 0, %s97
      %s114 = sphi 0, %s98
    $region4: #{tpu_custom_call.1} parent=1 // loop_header_branch
      %19 = sbr.rel (%p17) target = $region8
    $region5: #{tpu_custom_call.1} parent=1 // loop_body
      %s21 = ssub.s32 %s16, 1
      %s22 = ssub.s32 %s16, 2
      %s23 = sadd.s32 %s16, 1
      %s24 = ssub.s32 %s16, %s23
      %p25 = scmp.eq.s32.totalorder %s24, 0
      %s27 = sadd.s32 %s26, 1
      %s28 = scalar_select %p25, %s26, %s27
      %p31 = pneg %p25
      %p32 = scmp.eq.s32.totalorder %s16, 1
      %p33 = por %p31, %p32
      %p34 = scmp.ne.s32.totalorder %s26, %s29
      %p35 = scmp.eq.s32.totalorder %s16, 0
      %p36 = por %p34, %p35
      %p37 = scmp.ne.s32.totalorder %s26, %s29
      %p38 = scmp.eq.s32.totalorder %s21, 1
      %p39 = por %p37, %p38
      %p40 = scmp.ne.s32.totalorder %s29, %s30
      %p41 = scmp.eq.s32.totalorder %s21, 0
      %p42 = por %p40, %p41
      %p43 = scmp.ne.s32.totalorder %s29, %s30
      %p44 = scmp.eq.s32.totalorder %s22, 1
      %p45 = por %p43, %p44
      %p47 = scmp.ne.s32.totalorder %s30, %s46
      %p48 = scmp.eq.s32.totalorder %s22, 0
      %p49 = por %p47, %p48
      %s51 = sadd.s32 %s50, 1
      %p54 = scmp.eq.s32.totalorder %s16, 1
      %p55 = scmp.ne.s32.totalorder %s50, %s52
      %p56 = scmp.eq.s32.totalorder %s16, 0
      %p57 = por %p55, %p56
      %p58 = scmp.ne.s32.totalorder %s50, %s52
      %p59 = scmp.eq.s32.totalorder %s21, 1
      %p60 = por %p58, %p59
      %p61 = scmp.ne.s32.totalorder %s52, %s53
      %p62 = scmp.eq.s32.totalorder %s21, 0
      %p63 = por %p61, %p62
      %p64 = scmp.ne.s32.totalorder %s52, %s53
      %p65 = scmp.eq.s32.totalorder %s22, 1
      %p66 = por %p64, %p65
      %p68 = scmp.ne.s32.totalorder %s53, %s67
      %p69 = scmp.eq.s32.totalorder %s22, 0
      %p70 = por %p68, %p69
      %s72 = sadd.s32 %s71, 1
      %p75 = scmp.eq.s32.totalorder %s16, 1
      %p76 = scmp.ne.s32.totalorder %s71, %s73
      %p77 = scmp.eq.s32.totalorder %s16, 0
      %p78 = por %p76, %p77
      %p79 = scmp.ne.s32.totalorder %s71, %s73
      %p80 = scmp.eq.s32.totalorder %s21, 1
      %p81 = por %p79, %p80
      %p82 = scmp.ne.s32.totalorder %s73, %s74
      %p83 = scmp.eq.s32.totalorder %s21, 0
      %p84 = por %p82, %p83
      %p85 = scmp.ne.s32.totalorder %s73, %s74
      %p86 = scmp.eq.s32.totalorder %s22, 1
      %p87 = por %p85, %p86
      %p89 = scmp.ne.s32.totalorder %s74, %s88
      %p90 = scmp.eq.s32.totalorder %s22, 0
      %p91 = por %p89, %p90
      %s92 = ssub.s32 %s16, %s23
      %p93 = scmp.eq.s32.totalorder %s92, 0
      %s95 = sadd.s32 %s94, 1
      %s96 = scalar_select %p93, %s94, %s95
      %p99 = pneg %p93
      %p100 = scmp.eq.s32.totalorder %s16, 1
      %p101 = por %p99, %p100
      %p102 = scmp.ne.s32.totalorder %s94, %s97
      %p103 = scmp.eq.s32.totalorder %s16, 0
      %p104 = por %p102, %p103
      %p105 = scmp.ne.s32.totalorder %s94, %s97
      %p106 = scmp.eq.s32.totalorder %s21, 1
      %p107 = por %p105, %p106
      %p108 = scmp.ne.s32.totalorder %s97, %s98
      %p109 = scmp.eq.s32.totalorder %s21, 0
      %p110 = por %p108, %p109
      %p111 = scmp.ne.s32.totalorder %s97, %s98
      %p112 = scmp.eq.s32.totalorder %s22, 1
      %p113 = por %p111, %p112
      %p115 = scmp.ne.s32.totalorder %s98, %s114
      %p116 = scmp.eq.s32.totalorder %s22, 0
      %p117 = por %p115, %p116
      %p118 = scmp.le.s32.totalorder 1, %s16
      %p119 = scmp.lt.s32.totalorder %s16, 3
      %p120 = pnand %p118, %p119
      %p121 = pneg %p120
      // Predicated region
      $region9: #{tpu_custom_call.1} parent=5 // pred_check
        _
      $region10: #{tpu_custom_call.1} parent=5 // pred_check_branch
        %123 = sbr.rel (%p120) target = $region12
      $region11: #{tpu_custom_call.1} parent=5 // pred_region
        %s124 = ssub.s32 %s16, 1
        // Predicated region
        $region13: #{tpu_custom_call.1} parent=11 // pred_check
          %p125 = pneg %p63
        $region14: #{tpu_custom_call.1} parent=11 // pred_check_branch
          %127 = sbr.rel (%p125) target = $region16
        $region15: #{tpu_custom_call.1} parent=11 // pred_region
          %s129 = ssub.s32 256, 256
          %130 = vsyncadd [#allocation6], %s129
          %s131 = sshll.u32 [#allocation5], 4
          %s132 = int_to_ptr.vmem [resolvable:$true] %s131
          %137 = dma.hbm_to_vmem [thread:$0]  %s1, 256, %s132, [#allocation6], 64, 64, 4
        $region16: #{tpu_custom_call.1} parent=11 // pred_fallthru
          _
        // Predicated region
        $region17: #{tpu_custom_call.1} parent=11 // pred_check
          %p138 = pneg %p84
        $region18: #{tpu_custom_call.1} parent=11 // pred_check_branch
          %140 = sbr.rel (%p138) target = $region20
        $region19: #{tpu_custom_call.1} parent=11 // pred_region
          _
        $region20: #{tpu_custom_call.1} parent=11 // pred_fallthru
          _
      $region12: #{tpu_custom_call.1} parent=5 // pred_fallthru
        _
      %p141 = scmp.lt.s32.totalorder %s16, 2
      // Predicated region
      $region21: #{tpu_custom_call.1} parent=5 // pred_check
        %p142 = pneg %p141
      $region22: #{tpu_custom_call.1} parent=5 // pred_check_branch
        %144 = sbr.rel (%p142) target = $region24
      $region23: #{tpu_custom_call.1} parent=5 // pred_region
        // Predicated region
        $region25: #{tpu_custom_call.1} parent=23 // pred_check
          %p145 = pneg %p36
        $region26: #{tpu_custom_call.1} parent=23 // pred_check_branch
          %147 = sbr.rel (%p145) target = $region28
        $region27: #{tpu_custom_call.1} parent=23 // pred_region
          %s148 = sand.u32 %s26, 1
          %s149 = scalar_lea.sflag [#allocation3], %s148
          %s150 = sand.u32 %s26, 1
          %s151 = smul.addr %s150, 4
          %s152 = scalar_lea.vmem [#allocation2], %s151
          %s154 = ssub.s32 64, 64
          %155 = vsyncadd %s149, %s154
          %s156 = smul.addr %s16, 64
          %s157 = scalar_lea.hbm %s0, %s156
          %s159 = sshll.u32 %s152, 4
          %s160 = int_to_ptr.vmem [resolvable:$true] %s159
          %162 = dma.hbm_to_vmem [thread:$0]  %s157, 64, %s160, %s149
        $region28: #{tpu_custom_call.1} parent=23 // pred_fallthru
          _
      $region24: #{tpu_custom_call.1} parent=5 // pred_fallthru
        _
      %p163 = scmp.le.s32.totalorder 1, %s16
      %p164 = scmp.lt.s32.totalorder %s16, 3
      %p165 = pnand %p163, %p164
      %p166 = pneg %p165
      // Predicated region
      $region29: #{tpu_custom_call.1} parent=5 // pred_check
        _
      $region30: #{tpu_custom_call.1} parent=5 // pred_check_branch
        %168 = sbr.rel (%p165) target = $region32
      $region31: #{tpu_custom_call.1} parent=5 // pred_region
        %s169 = ssub.s32 %s16, 1
        %s170 = sand.u32 %s29, 1
        %s171 = scalar_lea.sflag [#allocation3], %s170
        %s172 = sand.u32 %s29, 1
        %s173 = smul.addr %s172, 4
        %s174 = scalar_lea.vmem [#allocation2], %s173
        // Predicated region
        $region33: #{tpu_custom_call.1} parent=31 // pred_check
          %p175 = pneg %p42
        $region34: #{tpu_custom_call.1} parent=31 // pred_check_branch
          %177 = sbr.rel (%p175) target = $region36
        $region35: #{tpu_custom_call.1} parent=31 // pred_region
          %178 = dma.done %s171, 64
        $region36: #{tpu_custom_call.1} parent=31 // pred_fallthru
          _
        // Predicated region
        $region37: #{tpu_custom_call.1} parent=31 // pred_check
          %p179 = pneg %p63
        $region38: #{tpu_custom_call.1} parent=31 // pred_check_branch
          %181 = sbr.rel (%p179) target = $region40
        $region39: #{tpu_custom_call.1} parent=31 // pred_region
          %182 = dma.done [#allocation6], 256
        $region40: #{tpu_custom_call.1} parent=31 // pred_fallthru
          _
        %s183 = sand.u32 %s29, 1
        %s184 = scalar_lea.sflag [#allocation3], %s183
        %s185 = sand.u32 %s29, 1
        %s186 = smul.addr %s185, 4
        %s187 = scalar_lea.vmem [#allocation2], %s186
        %p188 = pneg %p42
        %p189 = pneg %p39
        %p190 = pneg %p63
        %p191 = pneg %p60
        %p192 = pneg %p84
        %p193 = pneg %p81
        %p194 = pneg %p110
        %p195 = pneg %p107
        %s196 = sand.u32 %s97, 1
        %s197 = scalar_lea.sflag [#allocation4], %s196
        %s198 = sand.u32 %s97, 1
        %s199 = smul.addr %s198, 8
        %s200 = scalar_lea.vmem [#allocation7], %s199
        %v202 = vld [vmem:[%s174] sm:$0xf]
        %v203 = vld [vmem:[#allocation5] sm:$0xf]
        %v204 = vld [vmem:[#allocation5 + $0x4] sm:$0xf]
        %v205 = vld [vmem:[#allocation5 + $0x8] sm:$0xf]
        %v206 = vld [vmem:[#allocation5 + $0xc] sm:$0xf]
        %v207 = vld [vmem:[%s2] sm:$0x1]
        %v209 = vlaneseq
        %v210 = vshrl.u32 %v209, 7
        %v211 = vsub.s32 0, %v210
        %v212 = vrot.slane %v207, %v211
        %v218 = vunpack.c.l.b16 %v203
        %v219 = vunpack.c.l.b16 %v204
        %v220 = vunpack.c.l.b16 %v205
        %v221 = vunpack.c.l.b16 %v206
        %v222 = vpack.c.b16 %v219, %v218
        %v223 = vpack.c.b16 %v221, %v220
        %vm226 = vcmask 261120
        %v228 = vsel %vm226, %v202, 0
        %230 = vmatprep.subr.bf16.mxu0 0
        %231 = vmatpush1.bf16.msra.mxu0 %v222
        %232 = vmatprep.subr.bf16.mxu0 0
        %233 = vmatpush1.bf16.msra.mxu0 %v223
        %234 = vmatprep.subr.bf16.mxu0 0
        %235 = vmatpush1.bf16.msra.mxu0 0
        %236 = vmatprep.subr.bf16.mxu0 0
        %237 = vmatpush1.bf16.msra.mxu0 0
        %238 = vmatprep.subr.bf16.mxu0 0
        %239 = vmatpush1.bf16.msra.mxu0 0
        %240 = vmatprep.subr.bf16.mxu0 0
        %241 = vmatpush1.bf16.msra.mxu0 0
        %242 = vmatprep.subr.bf16.mxu0 0
        %243 = vmatpush1.bf16.msra.mxu0 0
        %244 = vmatprep.subr.bf16.mxu0 0
        %245 = vmatpush1.bf16.msra.mxu0 0
        %246 = vmatprep.subr.bf16.mxu0 0
        %247 = vmatpush1.bf16.msra.mxu0 0
        %248 = vmatprep.subr.bf16.mxu0 0
        %249 = vmatpush1.bf16.msra.mxu0 0
        %250 = vmatprep.subr.bf16.mxu0 0
        %251 = vmatpush1.bf16.msra.mxu0 0
        %252 = vmatprep.subr.bf16.mxu0 0
        %253 = vmatpush1.bf16.msra.mxu0 0
        %254 = vmatprep.subr.bf16.mxu0 0
        %255 = vmatpush1.bf16.msra.mxu0 0
        %256 = vmatprep.subr.bf16.mxu0 0
        %257 = vmatpush1.bf16.msra.mxu0 0
        %258 = vmatprep.subr.bf16.mxu0 0
        %259 = vmatpush1.bf16.msra.mxu0 0
        %260 = vmatprep.subr.bf16.mxu0 0
        %261 = vmatpush1.bf16.msra.mxu0 0
        %262 = vmatprep.mubr.bf16.mxu0 0
        %263 = vmatmul.mubr.bf16.gmra.mrb[0].mxu0 %v228
        %v264 = vpop.f32.mrb[0].mxu0
        %v265 = vadd.f32 %v212, %v264
        %v266 = vpop.f32.mrb[0].mxu0
        %v267 = vpop.f32.mrb[0].mxu0
        %v268 = vpop.f32.mrb[0].mxu0
        %269 = vdwg.mxu0
        %v270 = vmul.f32 %v265, 0.5
        %v271 = vmul.f32 %v265, 0.70710677
        %v272 = verf.f32.pop %v271
        %v273 = vadd.f32 %v272, 1.0
        %v274 = vmul.f32 %v270, %v273
        %275 = vst [vmem:[%s200] sm:$0xff] %v274
        %s276 = sand.u32 %s97, 1
        %s277 = scalar_lea.sflag [#allocation4], %s276
        %s278 = sand.u32 %s97, 1
        %s279 = smul.addr %s278, 8
        %s280 = scalar_lea.vmem [#allocation7], %s279
        // Predicated region
        $region41: #{tpu_custom_call.1} parent=31 // pred_check
          %p281 = pneg %p107
        $region42: #{tpu_custom_call.1} parent=31 // pred_check_branch
          %283 = sbr.rel (%p281) target = $region44
        $region43: #{tpu_custom_call.1} parent=31 // pred_region
          %s285 = ssub.s32 128, 128
          %286 = vsyncadd %s277, %s285
          %s287 = smul.addr %s21, 128
          %s288 = scalar_lea.hbm %s3, %s287
          %s290 = sshll.u32 %s280, 4
          %s291 = int_to_ptr.vmem [resolvable:$true] %s290
          %293 = dma.vmem_to_hbm [thread:$0]  %s291, 128, %s288, %s277
        $region44: #{tpu_custom_call.1} parent=31 // pred_fallthru
          _
      $region32: #{tpu_custom_call.1} parent=5 // pred_fallthru
        _
      %p294 = scmp.le.s32.totalorder 2, %s16
      // Predicated region
      $region45: #{tpu_custom_call.1} parent=5 // pred_check
        %p295 = pneg %p294
      $region46: #{tpu_custom_call.1} parent=5 // pred_check_branch
        %297 = sbr.rel (%p295) target = $region48
      $region47: #{tpu_custom_call.1} parent=5 // pred_region
        %s298 = ssub.s32 %s16, 2
        // Predicated region
        $region49: #{tpu_custom_call.1} parent=47 // pred_check
          %p299 = pneg %p113
        $region50: #{tpu_custom_call.1} parent=47 // pred_check_branch
          %301 = sbr.rel (%p299) target = $region52
        $region51: #{tpu_custom_call.1} parent=47 // pred_region
          %s302 = sand.u32 %s98, 1
          %s303 = scalar_lea.sflag [#allocation4], %s302
          %s304 = sand.u32 %s98, 1
          %s305 = smul.addr %s304, 8
          %s306 = scalar_lea.vmem [#allocation7], %s305
          %307 = dma.done %s303, 128
        $region52: #{tpu_custom_call.1} parent=47 // pred_fallthru
          _
      $region48: #{tpu_custom_call.1} parent=5 // pred_fallthru
        _
    $region6: #{tpu_custom_call.1} parent=1 // loop_footer
      %s20 = sadd.s32 1, %s16
    $region7: #{tpu_custom_call.1} parent=1 // loop_footer_branch
      %15 = sbr.rel target = $region3
    $region8: #{tpu_custom_call.1} parent=1 // loop_exit
      _
    %308 = vsyncpa [#allocation3], 1
    %s309 = scalar_lea.sflag [#allocation3], 1
    %310 = vsyncpa %s309, 1
    %311 = vsyncpa [#allocation6], 1
    %312 = vsyncpa [#allocation4], 1
    %s313 = scalar_lea.sflag [#allocation4], 1
    %314 = vsyncpa %s313, 1

</llo_original>
